<compile_context>
chip_gen: v7x
topology: tpu7x:2x2x1
jax: 0.10.0
libtpu: 0.0.40
codegen_flags: <defaults>
</compile_context>

<pallas_src>
import functools
import itertools

import numpy as np
import jax
import jax.numpy as jnp
from jax import lax
from jax.experimental import pallas as pl
from jax.experimental.pallas import tpu as pltpu


# ---------------------------------------------------------------------------
# small helpers
# ---------------------------------------------------------------------------

def _round_up(x, m):
    return ((x + m - 1) // m) * m


def _choose_point_tile(P, max_tile=2048):
    """Largest multiple-of-128 divisor of P that is <= max_tile, else full P."""
    if P <= max_tile:
        return P
    t = (max_tile // 128) * 128
    while t >= 128:
        if P % t == 0:
            return t
        t -= 128
    # TODO(synk): pad P in the wrapper when it has no multiple-of-128 divisor.
    return P


# ---------------------------------------------------------------------------
# Pallas kernels
# ---------------------------------------------------------------------------

def _matcher_cost_kernel(logits_ref, tgt_ids_ref, qpts_ref, tpts_ref, cost_ref,
                         acc_qt, acc_st, acc_neg, acc_sig, acc_tsum,
                         *, wc, wb, wd, P):
    """Per-batch matcher cost, P-tiled with accumulators:
       wc*(-softmax gather) + wb*BCE-matrix + wd*dice-matrix."""
    k = pl.program_id(1)
    kp = pl.num_programs(1)

    @pl.when(k == 0)
    def _init():
        acc_qt[...] = jnp.zeros_like(acc_qt)      # dot(qp, tp)     (Q, T)
        acc_st[...] = jnp.zeros_like(acc_st)      # dot(sig, tp)    (Q, T)
        acc_neg[...] = jnp.zeros_like(acc_neg)    # rowsum(neg)     (Q, 1)
        acc_sig[...] = jnp.zeros_like(acc_sig)    # rowsum(sig)     (Q, 1)
        acc_tsum[...] = jnp.zeros_like(acc_tsum)  # rowsum(tp)      (T, 1)

    qp = qpts_ref[0].astype(jnp.float32)          # (Q, TP)  pred mask point logits
    tp = tpts_ref[0].astype(jnp.float32)          # (T, TP)  gt mask point values

    # shared transcendental: e = exp(-|x|) serves both BCE log-term and sigmoid
    e = jnp.exp(-jnp.abs(qp))
    log_term = jnp.log(1.0 + e)
    neg = jnp.maximum(qp, 0.0) + log_term         # BCE(x, 0)
    r = pl.reciprocal(1.0 + e, approx=True)
    sig = jnp.where(qp >= 0.0, r, e * r)          # sigmoid(x) reusing e

    # lane reductions (XLU slot, overlaps the MXU matmuls)
    acc_neg[...] += jnp.sum(neg, axis=-1, keepdims=True)
    acc_sig[...] += jnp.sum(sig, axis=-1, keepdims=True)
    acc_tsum[...] += jnp.sum(tp, axis=-1, keepdims=True)

    # single pair of (Q,TP)x(TP,T) MXU contractions, bf16 operands / f32 accumulate
    dn = (((1,), (1,)), ((), ()))
    tp_b = tp.astype(jnp.bfloat16)
    acc_qt[...] += lax.dot_general(qp.astype(jnp.bfloat16), tp_b, dn,
                                   preferred_element_type=jnp.float32)
    acc_st[...] += lax.dot_general(sig.astype(jnp.bfloat16), tp_b, dn,
                                   preferred_element_type=jnp.float32)

    @pl.when(k == kp - 1)
    def _finalize():
        logits = logits_ref[0].astype(jnp.float32)   # (Q, C1)
        tgt_ids = tgt_ids_ref[0]                     # (1, T) int32
        C1 = logits.shape[1]
        T = tgt_ids.shape[1]

        # softmax class cost (tiny, once per batch element)
        m = jnp.max(logits, axis=-1, keepdims=True)
        el = jnp.exp(logits - m)
        prob = el / jnp.sum(el, axis=-1, keepdims=True)
        onehot_ct = (lax.broadcasted_iota(jnp.int32, (C1, T), 0) == tgt_ids).astype(jnp.float32)
        cost_class = -jnp.dot(prob, onehot_ct, preferred_element_type=jnp.float32)  # (Q, T)

        # folded BCE matrix: rowsum(neg) - dot(qp, tp)
        cost_bce = (acc_neg[...] - acc_qt[...]) * (1.0 / P)

        # dice matrix
        t_row = acc_tsum[...].T                                       # (1, T)
        cost_dice = 1.0 - (2.0 * acc_st[...] + 1.0) / (acc_sig[...] + t_row + 1.0)

        cost_ref[0] = wc * cost_class + wb * cost_bce + wd * cost_dice


def _weighted_ce_kernel(logits_ref, tgt_ref, w_ref, out_ref, num_acc, den_acc):
    """F.cross_entropy(logits, targets, weight), 'mean' reduction, N-tiled.
       Padded rows carry a sentinel target (== C1) so their weight is exactly 0."""
    i = pl.program_id(0)

    @pl.when(i == 0)
    def _init():
        num_acc[...] = jnp.zeros_like(num_acc)
        den_acc[...] = jnp.zeros_like(den_acc)

    logits = logits_ref[...].astype(jnp.float32)      # (TN, C1)
    tgt = tgt_ref[...]                                 # (TN, 1) int32
    w = w_ref[...]                                     # (1, C1)
    TN, C1 = logits.shape

    onehot = (lax.broadcasted_iota(jnp.int32, (TN, C1), 1) == tgt).astype(jnp.float32)
    m = jnp.max(logits, axis=-1, keepdims=True)
    lse = m + jnp.log(jnp.sum(jnp.exp(logits - m), axis=-1, keepdims=True))   # (TN, 1)
    picked = jnp.sum(logits * onehot, axis=-1, keepdims=True)                 # (TN, 1)
    wn = jnp.sum(w * onehot, axis=-1, keepdims=True)                          # (TN, 1)

    num_acc[...] += jnp.sum(wn * (lse - picked), axis=0, keepdims=True)
    den_acc[...] += jnp.sum(wn, axis=0, keepdims=True)

    @pl.when(i == pl.num_programs(0) - 1)
    def _finalize():
        out_ref[...] = num_acc[...] / den_acc[...]


def _mask_loss_kernel(logits_ref, labels_ref, bce_ref, dice_ref, bce_acc, dice_acc,
                      *, inv_num_masks, M, TM):
    """sigmoid_ce_loss and dice_loss over (M, P) point logits / labels, M-tiled."""
    i = pl.program_id(0)

    @pl.when(i == 0)
    def _init():
        bce_acc[...] = jnp.zeros_like(bce_acc)
        dice_acc[...] = jnp.zeros_like(dice_acc)

    x = logits_ref[...].astype(jnp.float32)           # (TM, P)
    y = labels_ref[...].astype(jnp.float32)
    P = x.shape[1]

    # zero-out padded rows exactly
    rows = i * TM + lax.broadcasted_iota(jnp.int32, (TM, 1), 0)
    valid = (rows < M).astype(jnp.float32)

    e = jnp.exp(-jnp.abs(x))
    log_term = jnp.log(1.0 + e)
    bce = jnp.maximum(x, 0.0) - x * y + log_term
    bce_row = jnp.sum(bce, axis=-1, keepdims=True) * (1.0 / P)          # mean over points
    bce_acc[...] += jnp.sum(valid * bce_row, axis=0, keepdims=True)

    r = pl.reciprocal(1.0 + e, approx=True)
    sig = jnp.where(x >= 0.0, r, e * r)
    numer = 2.0 * jnp.sum(sig * y, axis=-1, keepdims=True)
    denom = jnp.sum(sig, axis=-1, keepdims=True) + jnp.sum(y, axis=-1, keepdims=True)
    dice = 1.0 - (numer + 1.0) / (denom + 1.0)
    dice_acc[...] += jnp.sum(valid * dice, axis=0, keepdims=True)

    @pl.when(i == pl.num_programs(0) - 1)
    def _finalize():
        bce_ref[...] = bce_acc[...] * inv_num_masks
        dice_ref[...] = dice_acc[...] * inv_num_masks


# ---------------------------------------------------------------------------
# pallas_call wrappers
# ---------------------------------------------------------------------------

def matcher_cost(class_logits, tgt_ids, q_pts, t_pts, wc, wb, wd):
    B, Q, C1 = class_logits.shape
    T = tgt_ids.shape[-1]
    P = q_pts.shape[-1]
    TP = _choose_point_tile(P)
    KP = P // TP
    kernel = functools.partial(_matcher_cost_kernel,
                               wc=float(wc), wb=float(wb), wd=float(wd), P=P)
    return pl.pallas_call(
        kernel,
        out_shape=jax.ShapeDtypeStruct((B, Q, T), jnp.float32),
        grid=(B, KP),
        in_specs=[pl.BlockSpec((1, Q, C1), lambda b, k: (b, 0, 0)),
                  pl.BlockSpec((1, 1, T), lambda b, k: (b, 0, 0)),
                  pl.BlockSpec((1, Q, TP), lambda b, k: (b, 0, k)),
                  pl.BlockSpec((1, T, TP), lambda b, k: (b, 0, k))],
        out_specs=pl.BlockSpec((1, Q, T), lambda b, k: (b, 0, 0)),
        scratch_shapes=[pltpu.VMEM((Q, T), jnp.float32),   # dot(qp, tp)
                        pltpu.VMEM((Q, T), jnp.float32),   # dot(sig, tp)
                        pltpu.VMEM((Q, 1), jnp.float32),   # rowsum(neg)
                        pltpu.VMEM((Q, 1), jnp.float32),   # rowsum(sig)
                        pltpu.VMEM((T, 1), jnp.float32)],  # rowsum(tp)
        compiler_params=pltpu.CompilerParams(
            dimension_semantics=("parallel", "arbitrary")),
    )(class_logits.astype(jnp.float32),
      tgt_ids.reshape(B, 1, T).astype(jnp.int32),
      q_pts.astype(jnp.float32),
      t_pts.astype(jnp.float32))


def weighted_cross_entropy(logits_flat, targets_flat, class_weights):
    N, C1 = logits_flat.shape
    TN = 512 if N >= 512 else _round_up(N, 8)
    Np = _round_up(N, TN)
    pad = Np - N
    logits_p = jnp.pad(logits_flat.astype(jnp.float32), ((0, pad), (0, 0)))
    tgt_p = jnp.pad(targets_flat.reshape(N, 1).astype(jnp.int32),
                    ((0, pad), (0, 0)), constant_values=C1)  # sentinel -> zero weight
    out = pl.pallas_call(
        _weighted_ce_kernel,
        out_shape=jax.ShapeDtypeStruct((1, 1), jnp.float32),
        grid=(Np // TN,),
        in_specs=[pl.BlockSpec((TN, C1), lambda i: (i, 0)),
                  pl.BlockSpec((TN, 1), lambda i: (i, 0)),
                  pl.BlockSpec((1, C1), lambda i: (0, 0))],
        out_specs=pl.BlockSpec((1, 1), lambda i: (0, 0)),
        scratch_shapes=[pltpu.VMEM((1, 1), jnp.float32),
                        pltpu.VMEM((1, 1), jnp.float32)],
        compiler_params=pltpu.CompilerParams(dimension_semantics=("arbitrary",)),
    )(logits_p, tgt_p, class_weights.reshape(1, C1).astype(jnp.float32))
    return out[0, 0]


def point_mask_losses(point_logits, point_labels, num_masks):
    M, P = point_logits.shape
    TM = 256 if M >= 256 else _round_up(M, 8)
    Mp = _round_up(M, TM)
    pad = Mp - M
    logits_p = jnp.pad(point_logits.astype(jnp.float32), ((0, pad), (0, 0)))
    labels_p = jnp.pad(point_labels.astype(jnp.float32), ((0, pad), (0, 0)))
    kernel = functools.partial(_mask_loss_kernel,
                               inv_num_masks=1.0 / float(num_masks), M=M, TM=TM)
    bce, dice = pl.pallas_call(
        kernel,
        out_shape=(jax.ShapeDtypeStruct((1, 1), jnp.float32),
                   jax.ShapeDtypeStruct((1, 1), jnp.float32)),
        grid=(Mp // TM,),
        in_specs=[pl.BlockSpec((TM, P), lambda i: (i, 0)),
                  pl.BlockSpec((TM, P), lambda i: (i, 0))],
        out_specs=(pl.BlockSpec((1, 1), lambda i: (0, 0)),
                   pl.BlockSpec((1, 1), lambda i: (0, 0))),
        scratch_shapes=[pltpu.VMEM((1, 1), jnp.float32),
                        pltpu.VMEM((1, 1), jnp.float32)],
        compiler_params=pltpu.CompilerParams(dimension_semantics=("arbitrary",)),
    )(logits_p, labels_p)
    return bce[0, 0], dice[0, 0]


# ---------------------------------------------------------------------------
# Plain-JAX / host glue (sampling, grid_sample, matching)
# ---------------------------------------------------------------------------

def point_sample(masks, coords):
    """detectron2 point_sample(masks[:,None], coords, align_corners=False).squeeze(1).
    masks: (N, H, W) float; coords: (N, P, 2) in [0,1], coords[...,0]=x (W), [...,1]=y (H)."""
    N, H, W = masks.shape
    x = coords[..., 0] * W - 0.5
    y = coords[..., 1] * H - 0.5
    x0 = jnp.floor(x)
    y0 = jnp.floor(y)

    def gather(xi, yi):
        xi_i = xi.astype(jnp.int32)
        yi_i = yi.astype(jnp.int32)
        valid = (xi_i >= 0) & (xi_i < W) & (yi_i >= 0) & (yi_i < H)
        xi_c = jnp.clip(xi_i, 0, W - 1)
        yi_c = jnp.clip(yi_i, 0, H - 1)
        vals = jax.vmap(lambda m, yy, xx: m[yy, xx])(masks, yi_c, xi_c)
        return jnp.where(valid, vals, 0.0)

    wx1 = x - x0
    wx0 = 1.0 - wx1
    wy1 = y - y0
    wy0 = 1.0 - wy1
    v00 = gather(x0, y0)
    v01 = gather(x0 + 1.0, y0)
    v10 = gather(x0, y0 + 1.0)
    v11 = gather(x0 + 1.0, y0 + 1.0)
    return wy0 * (wx0 * v00 + wx1 * v01) + wy1 * (wx0 * v10 + wx1 * v11)


def _linear_sum_assignment_bruteforce(cost):
    # TODO(synk): scipy.optimize.linear_sum_assignment has no Pallas equivalent;
    # exact brute-force assignment on host (viable only for tiny Q, T).
    Q, T = cost.shape
    best_sum, best_perm = None, None
    for perm in itertools.permutations(range(Q), T):
        s = sum(cost[perm[t], t] for t in range(T))
        if best_sum is None or s < best_sum:
            best_sum, best_perm = s, perm
    src = np.asarray(best_perm, dtype=np.int64)
    tgt = np.arange(T, dtype=np.int64)
    order = np.argsort(src)
    return src[order], tgt[order]


class SetClassSegmentLossPallas:
    def __init__(self, num_classes, weight_bg, weight_class, weight_bce, weight_dice,
                 num_points, oversample_ratio, importance_sample_ratio):
        self.num_classes = num_classes
        self.weight_class = weight_class
        self.weight_bce = weight_bce
        self.weight_dice = weight_dice
        self.num_points = num_points
        self.oversample_ratio = oversample_ratio
        self.importance_sample_ratio = importance_sample_ratio
        # deterministic buffer init, mirrors nn.Module.__init__ (class_weights[-1] = weight_bg)
        self.class_weights = jnp.ones((num_classes + 1,), jnp.float32).at[-1].set(weight_bg)

    # ---- matcher -----------------------------------------------------------
    def _match(self, pred_logits, pred_masks, gt_classes, gt_masks, key):
        B, Q, _ = pred_logits.shape
        T = gt_classes.shape[1]
        P = self.num_points
        keys = jax.random.split(key, B)
        q_pts, t_pts = [], []
        for b in range(B):
            coords = jax.random.uniform(keys[b], (P, 2), jnp.float32)
            q_pts.append(point_sample(pred_masks[b], jnp.broadcast_to(coords, (Q, P, 2))))
            t_pts.append(point_sample(gt_masks[b], jnp.broadcast_to(coords, (T, P, 2))))
        cost = matcher_cost(pred_logits, gt_classes, jnp.stack(q_pts), jnp.stack(t_pts),
                            self.weight_class, self.weight_bce, self.weight_dice)
        # TODO(synk): device_get forces a host sync before the assignment; unavoidable
        # while the Hungarian step stays on host.
        cost_np = np.asarray(jax.device_get(cost))
        return [_linear_sum_assignment_bruteforce(cost_np[b]) for b in range(B)]

    # ---- uncertainty-based point sampling -----------------------------------
    def _get_uncertain_point_coords(self, coarse_logits, key_a, key_b):
        M = coarse_logits.shape[0]
        num_sampled = int(self.num_points * self.oversample_ratio)
        rand_coords = jax.random.uniform(key_a, (M, num_sampled, 2), jnp.float32)
        pt_logits = point_sample(coarse_logits, rand_coords)
        uncertainties = -jnp.abs(pt_logits)
        num_uncertain = int(self.importance_sample_ratio * self.num_points)
        num_random = self.num_points - num_uncertain
        _, idx = lax.top_k(uncertainties, num_uncertain)
        idx3 = jnp.broadcast_to(idx[:, :, None], (M, num_uncertain, 2))
        coords = jnp.take_along_axis(rand_coords, idx3, axis=1)
        if num_random > 0:
            coords = jnp.concatenate(
                [coords, jax.random.uniform(key_b, (M, num_random, 2), jnp.float32)], axis=1)
        return coords

    # ---- forward -------------------------------------------------------------
    def __call__(self, pred_logits, pred_masks, gt_classes, gt_masks, key):
        B, Q = pred_logits.shape[:2]
        T = gt_classes.shape[1]
        num_masks = max(float(B * T), 1.0)  # world_size == 1

        k_match, k_s1, k_s2 = jax.random.split(key, 3)
        indices = self._match(pred_logits, pred_masks, gt_classes, gt_masks, k_match)

        batch_idx = np.concatenate([np.full_like(src, b) for b, (src, _) in enumerate(indices)])
        src_idx = np.concatenate([src for src, _ in indices])
        tgt_idx = np.concatenate([tgt for _, tgt in indices])

        # loss_labels (weighted cross entropy; reference's self.empty_weight == class_weights)
        gt_classes_np = np.asarray(jax.device_get(gt_classes))
        target_classes = np.full((B, Q), self.num_classes, dtype=np.int32)
        target_classes[batch_idx, src_idx] = gt_classes_np[batch_idx, tgt_idx]
        loss_class = weighted_cross_entropy(
            pred_logits.astype(jnp.float32).reshape(B * Q, -1),
            jnp.asarray(target_classes.reshape(B * Q)),
            self.class_weights)

        # loss_masks
        src_masks = pred_masks[batch_idx, src_idx]                    # (M, H, W)
        target_masks = gt_masks[batch_idx, tgt_idx].astype(src_masks.dtype)
        point_coords = self._get_uncertain_point_coords(src_masks, k_s1, k_s2)
        point_labels = point_sample(target_masks, point_coords)
        point_logits = point_sample(src_masks, point_coords)
        loss_bce, loss_dice = point_mask_losses(point_logits, point_labels, num_masks)

        return {
            'loss_class': self.weight_class * loss_class,
            'loss_bce': self.weight_class * loss_bce,   # matches reference (uses weight_class here)
            'loss_dice': self.weight_dice * loss_dice,
        }


# ---------------------------------------------------------------------------
# demo
# ---------------------------------------------------------------------------

if __name__ == "__main__":
    key = jax.random.PRNGKey(0)
    B, Q, H, W = 2, 8, 16, 16
    num_classes = 5
    T = 3  # targets per image (fixed -> nested-tensor padding is trivial)

    criterion = SetClassSegmentLossPallas(
        num_classes=num_classes, weight_bg=0.1, weight_class=2.0,
        weight_bce=5.0, weight_dice=5.0, num_points=16,
        oversample_ratio=3.0, importance_sample_ratio=0.75)

    k1, k2, k3, k4, k5 = jax.random.split(key, 5)
    pred_logits = jax.random.normal(k1, (B, Q, num_classes + 1), jnp.float32)
    pred_masks = jax.random.normal(k2, (B, Q, H, W), jnp.float32)
    gt_classes = jax.random.randint(k3, (B, T), 0, num_classes, dtype=jnp.int32)
    gt_masks = jax.random.bernoulli(k4, 0.5, (B, T, H, W)).astype(jnp.float32)

    losses = criterion(pred_logits, pred_masks, gt_classes, gt_masks, key=k5)
    for v in jax.tree_util.tree_leaves(losses):
        jax.block_until_ready(v)
    print("KERNEL_OK")
</pallas_src>

<mosaic_0001>
module attributes {stable_mosaic.version = 11 : i64} {
  func.func @_matcher_cost_kernel(%arg0: i32, %arg1: i32, %arg2: memref<1x8x6xf32, #tpu.memory_space<vmem>>, %arg3: memref<1x1x3xi32, #tpu.memory_space<vmem>>, %arg4: memref<1x8x16xf32, #tpu.memory_space<vmem>>, %arg5: memref<1x3x16xf32, #tpu.memory_space<vmem>>, %arg6: memref<1x8x3xf32, #tpu.memory_space<vmem>>, %arg7: memref<8x3xf32, #tpu.memory_space<vmem>>, %arg8: memref<8x3xf32, #tpu.memory_space<vmem>>, %arg9: memref<8x1xf32, #tpu.memory_space<vmem>>, %arg10: memref<8x1xf32, #tpu.memory_space<vmem>>, %arg11: memref<3x1xf32, #tpu.memory_space<vmem>>) attributes {dimension_semantics = [#tpu.dimension_semantics<parallel>, #tpu.dimension_semantics<arbitrary>], iteration_bounds = array<i64: 2, 1>, scalar_prefetch = 0 : i64, scratch_operands = 5 : i64, tpu.core_type = #tpu.core_type<tc>, window_params = [{transform_indices = @transform_0, window_bounds = array<i64: 1, 8, 6>}, {transform_indices = @transform_1, window_bounds = array<i64: 1, 1, 3>}, {transform_indices = @transform_2, window_bounds = array<i64: 1, 8, 16>}, {transform_indices = @transform_3, window_bounds = array<i64: 1, 3, 16>}, {transform_indices = @transform_4, window_bounds = array<i64: 1, 8, 3>}]} {
    %c0_i32 = arith.constant 0 : i32
    %0 = arith.cmpi eq, %arg1, %c0_i32 : i32
    %1 = arith.extui %0 : i1 to i32
    %c0_i32_0 = arith.constant 0 : i32
    %2 = arith.cmpi ne, %1, %c0_i32_0 : i32
    scf.if %2 {
      %cst_37 = arith.constant 0.000000e+00 : f32
      %53 = vector.broadcast %cst_37 : f32 to vector<8x3xf32>
      %c0_38 = arith.constant 0 : index
      %c0_39 = arith.constant 0 : index
      %54 = vector.load %arg7[%c0_38, %c0_39] : memref<8x3xf32, #tpu.memory_space<vmem>>, vector<8x3xf32>
      tpu.vector_store %arg7[%c0_38, %c0_39], %53 {strides = array<i32>} : memref<8x3xf32, #tpu.memory_space<vmem>>, vector<8x3xf32>,
      %cst_40 = arith.constant 0.000000e+00 : f32
      %55 = vector.broadcast %cst_40 : f32 to vector<8x3xf32>
      %c0_41 = arith.constant 0 : index
      %c0_42 = arith.constant 0 : index
      %56 = vector.load %arg8[%c0_41, %c0_42] : memref<8x3xf32, #tpu.memory_space<vmem>>, vector<8x3xf32>
      tpu.vector_store %arg8[%c0_41, %c0_42], %55 {strides = array<i32>} : memref<8x3xf32, #tpu.memory_space<vmem>>, vector<8x3xf32>,
      %cst_43 = arith.constant 0.000000e+00 : f32
      %57 = vector.broadcast %cst_43 : f32 to vector<8x1xf32>
      %c0_44 = arith.constant 0 : index
      %c0_45 = arith.constant 0 : index
      %58 = vector.load %arg9[%c0_44, %c0_45] : memref<8x1xf32, #tpu.memory_space<vmem>>, vector<8x1xf32>
      tpu.vector_store %arg9[%c0_44, %c0_45], %57 {strides = array<i32>} : memref<8x1xf32, #tpu.memory_space<vmem>>, vector<8x1xf32>,
      %cst_46 = arith.constant 0.000000e+00 : f32
      %59 = vector.broadcast %cst_46 : f32 to vector<8x1xf32>
      %c0_47 = arith.constant 0 : index
      %c0_48 = arith.constant 0 : index
      %60 = vector.load %arg10[%c0_47, %c0_48] : memref<8x1xf32, #tpu.memory_space<vmem>>, vector<8x1xf32>
      tpu.vector_store %arg10[%c0_47, %c0_48], %59 {strides = array<i32>} : memref<8x1xf32, #tpu.memory_space<vmem>>, vector<8x1xf32>,
      %cst_49 = arith.constant 0.000000e+00 : f32
      %61 = vector.broadcast %cst_49 : f32 to vector<3x1xf32>
      %c0_50 = arith.constant 0 : index
      %c0_51 = arith.constant 0 : index
      %62 = vector.load %arg11[%c0_50, %c0_51] : memref<3x1xf32, #tpu.memory_space<vmem>>, vector<3x1xf32>
      tpu.vector_store %arg11[%c0_50, %c0_51], %61 {strides = array<i32>} : memref<3x1xf32, #tpu.memory_space<vmem>>, vector<3x1xf32>,
    } else {
    }
    %c0 = arith.constant 0 : index
    %c0_1 = arith.constant 0 : index
    %c0_2 = arith.constant 0 : index
    %3 = vector.load %arg4[%c0, %c0_1, %c0_2] : memref<1x8x16xf32, #tpu.memory_space<vmem>>, vector<1x8x16xf32>
    %4 = vector.shape_cast %3 : vector<1x8x16xf32> to vector<8x16xf32>
    %c0_3 = arith.constant 0 : index
    %c0_4 = arith.constant 0 : index
    %c0_5 = arith.constant 0 : index
    %5 = vector.load %arg5[%c0_3, %c0_4, %c0_5] : memref<1x3x16xf32, #tpu.memory_space<vmem>>, vector<1x3x16xf32>
    %6 = vector.shape_cast %5 : vector<1x3x16xf32> to vector<3x16xf32>
    %7 = math.absf %4 : vector<8x16xf32>
    %cst = arith.constant 0.000000e+00 : f32
    %8 = vector.broadcast %cst : f32 to vector<8x16xf32>
    %9 = arith.subf %8, %7 : vector<8x16xf32>
    %10 = math.exp %9 : vector<8x16xf32>
    %cst_6 = arith.constant 1.000000e+00 : f32
    %11 = vector.broadcast %cst_6 : f32 to vector<8x16xf32>
    %12 = arith.addf %11, %10 : vector<8x16xf32>
    %13 = math.log %12 : vector<8x16xf32>
    %cst_7 = arith.constant 0.000000e+00 : f32
    %14 = vector.broadcast %cst_7 : f32 to vector<8x16xf32>
    %15 = arith.maximumf %4, %14 : vector<8x16xf32>
    %16 = arith.addf %15, %13 : vector<8x16xf32>
    %cst_8 = arith.constant 1.000000e+00 : f32
    %17 = vector.broadcast %cst_8 : f32 to vector<8x16xf32>
    %18 = arith.addf %17, %10 : vector<8x16xf32>
    %19 = tpu.reciprocal %18 {approx = true} : vector<8x16xf32> -> vector<8x16xf32>
    %cst_9 = arith.constant 0.000000e+00 : f32
    %20 = vector.broadcast %cst_9 : f32 to vector<8x16xf32>
    %21 = arith.cmpf oge, %4, %20 : vector<8x16xf32>
    %22 = arith.mulf %10, %19 : vector<8x16xf32>
    %23 = arith.select %21, %19, %22 : vector<8x16xi1>, vector<8x16xf32>
    %c0_10 = arith.constant 0 : index
    %c0_11 = arith.constant 0 : index
    %24 = vector.load %arg9[%c0_10, %c0_11] : memref<8x1xf32, #tpu.memory_space<vmem>>, vector<8x1xf32>
    %cst_12 = arith.constant dense<0.000000e+00> : vector<8xf32>
    %25 = vector.multi_reduction <add>, %16, %cst_12 [1] : vector<8x16xf32> to vector<8xf32>
    %26 = vector.shape_cast %25 : vector<8xf32> to vector<8x1xf32>
    %27 = arith.addf %24, %26 : vector<8x1xf32>
    %c0_13 = arith.constant 0 : index
    %c0_14 = arith.constant 0 : index
    %28 = vector.load %arg9[%c0_13, %c0_14] : memref<8x1xf32, #tpu.memory_space<vmem>>, vector<8x1xf32>
    tpu.vector_store %arg9[%c0_13, %c0_14], %27 {strides = array<i32>} : memref<8x1xf32, #tpu.memory_space<vmem>>, vector<8x1xf32>,
    %c0_15 = arith.constant 0 : index
    %c0_16 = arith.constant 0 : index
    %29 = vector.load %arg10[%c0_15, %c0_16] : memref<8x1xf32, #tpu.memory_space<vmem>>, vector<8x1xf32>
    %cst_17 = arith.constant dense<0.000000e+00> : vector<8xf32>
    %30 = vector.multi_reduction <add>, %23, %cst_17 [1] : vector<8x16xf32> to vector<8xf32>
    %31 = vector.shape_cast %30 : vector<8xf32> to vector<8x1xf32>
    %32 = arith.addf %29, %31 : vector<8x1xf32>
    %c0_18 = arith.constant 0 : index
    %c0_19 = arith.constant 0 : index
    %33 = vector.load %arg10[%c0_18, %c0_19] : memref<8x1xf32, #tpu.memory_space<vmem>>, vector<8x1xf32>
    tpu.vector_store %arg10[%c0_18, %c0_19], %32 {strides = array<i32>} : memref<8x1xf32, #tpu.memory_space<vmem>>, vector<8x1xf32>,
    %c0_20 = arith.constant 0 : index
    %c0_21 = arith.constant 0 : index
    %34 = vector.load %arg11[%c0_20, %c0_21] : memref<3x1xf32, #tpu.memory_space<vmem>>, vector<3x1xf32>
    %cst_22 = arith.constant dense<0.000000e+00> : vector<3xf32>
    %35 = vector.multi_reduction <add>, %6, %cst_22 [1] : vector<3x16xf32> to vector<3xf32>
    %36 = vector.shape_cast %35 : vector<3xf32> to vector<3x1xf32>
    %37 = arith.addf %34, %36 : vector<3x1xf32>
    %c0_23 = arith.constant 0 : index
    %c0_24 = arith.constant 0 : index
    %38 = vector.load %arg11[%c0_23, %c0_24] : memref<3x1xf32, #tpu.memory_space<vmem>>, vector<3x1xf32>
    tpu.vector_store %arg11[%c0_23, %c0_24], %37 {strides = array<i32>} : memref<3x1xf32, #tpu.memory_space<vmem>>, vector<3x1xf32>,
    %39 = arith.truncf %6 : vector<3x16xf32> to vector<3x16xbf16>
    %c0_25 = arith.constant 0 : index
    %c0_26 = arith.constant 0 : index
    %40 = vector.load %arg7[%c0_25, %c0_26] : memref<8x3xf32, #tpu.memory_space<vmem>>, vector<8x3xf32>
    %41 = arith.truncf %4 : vector<8x16xf32> to vector<8x16xbf16>
    %cst_27 = arith.constant dense<0.000000e+00> : vector<8x3xf32>
    %42 = tpu.matmul %41, %39, %cst_27 {dimension_numbers = #tpu.dot_dimension_numbers<[1], [1], [0], [0], [0, 0, 1, 0], [], []>} : vector<8x16xbf16>, vector<3x16xbf16>, vector<8x3xf32> -> vector<8x3xf32>
    %43 = arith.addf %40, %42 : vector<8x3xf32>
    %c0_28 = arith.constant 0 : index
    %c0_29 = arith.constant 0 : index
    %44 = vector.load %arg7[%c0_28, %c0_29] : memref<8x3xf32, #tpu.memory_space<vmem>>, vector<8x3xf32>
    tpu.vector_store %arg7[%c0_28, %c0_29], %43 {strides = array<i32>} : memref<8x3xf32, #tpu.memory_space<vmem>>, vector<8x3xf32>,
    %c0_30 = arith.constant 0 : index
    %c0_31 = arith.constant 0 : index
    %45 = vector.load %arg8[%c0_30, %c0_31] : memref<8x3xf32, #tpu.memory_space<vmem>>, vector<8x3xf32>
    %46 = arith.truncf %23 : vector<8x16xf32> to vector<8x16xbf16>
    %cst_32 = arith.constant dense<0.000000e+00> : vector<8x3xf32>
    %47 = tpu.matmul %46, %39, %cst_32 {dimension_numbers = #tpu.dot_dimension_numbers<[1], [1], [0], [0], [0, 0, 1, 0], [], []>} : vector<8x16xbf16>, vector<3x16xbf16>, vector<8x3xf32> -> vector<8x3xf32>
    %48 = arith.addf %45, %47 : vector<8x3xf32>
    %c0_33 = arith.constant 0 : index
    %c0_34 = arith.constant 0 : index
    %49 = vector.load %arg8[%c0_33, %c0_34] : memref<8x3xf32, #tpu.memory_space<vmem>>, vector<8x3xf32>
    tpu.vector_store %arg8[%c0_33, %c0_34], %48 {strides = array<i32>} : memref<8x3xf32, #tpu.memory_space<vmem>>, vector<8x3xf32>,
    %c0_i32_35 = arith.constant 0 : i32
    %50 = arith.cmpi eq, %arg1, %c0_i32_35 : i32
    %51 = arith.extui %50 : i1 to i32
    %c0_i32_36 = arith.constant 0 : i32
    %52 = arith.cmpi ne, %51, %c0_i32_36 : i32
    scf.if %52 {
      %c0_37 = arith.constant 0 : index
      %c0_38 = arith.constant 0 : index
      %c0_39 = arith.constant 0 : index
      %53 = vector.load %arg2[%c0_37, %c0_38, %c0_39] : memref<1x8x6xf32, #tpu.memory_space<vmem>>, vector<1x8x6xf32>
      %54 = vector.shape_cast %53 : vector<1x8x6xf32> to vector<8x6xf32>
      %c0_40 = arith.constant 0 : index
      %c0_41 = arith.constant 0 : index
      %c0_42 = arith.constant 0 : index
      %55 = vector.load %arg3[%c0_40, %c0_41, %c0_42] : memref<1x1x3xi32, #tpu.memory_space<vmem>>, vector<1x1x3xi32>
      %56 = vector.shape_cast %55 : vector<1x1x3xi32> to vector<1x3xi32>
      %cst_43 = arith.constant dense<0xFF800000> : vector<8xf32>
      %57 = vector.multi_reduction <maximumf>, %54, %cst_43 [1] : vector<8x6xf32> to vector<8xf32>
      %58 = vector.shape_cast %57 : vector<8xf32> to vector<8x1xf32>
      %59 = vector.broadcast %58 : vector<8x1xf32> to vector<8x6xf32>
      %60 = arith.subf %54, %59 : vector<8x6xf32>
      %61 = math.exp %60 : vector<8x6xf32>
      %cst_44 = arith.constant dense<0.000000e+00> : vector<8xf32>
      %62 = vector.multi_reduction <add>, %61, %cst_44 [1] : vector<8x6xf32> to vector<8xf32>
      %63 = vector.shape_cast %62 : vector<8xf32> to vector<8x1xf32>
      %64 = vector.broadcast %63 : vector<8x1xf32> to vector<8x6xf32>
      %65 = arith.divf %61, %64 : vector<8x6xf32>
      %66 = tpu.iota {dimensions = array<i32: 0>} : vector<6x3xi32>
      %67 = vector.broadcast %56 : vector<1x3xi32> to vector<6x3xi32>
      %68 = arith.cmpi eq, %66, %67 : vector<6x3xi32>
      %69 = arith.extui %68 : vector<6x3xi1> to vector<6x3xi32>
      %70 = arith.sitofp %69 : vector<6x3xi32> to vector<6x3xf32>
      %cst_45 = arith.constant dense<0.000000e+00> : vector<8x3xf32>
      %71 = tpu.matmul %65, %70, %cst_45 {dimension_numbers = #tpu.dot_dimension_numbers<[1], [0], [0], [1], [0, 0, 1, 1], [], []>} : vector<8x6xf32>, vector<6x3xf32>, vector<8x3xf32> -> vector<8x3xf32>
      %cst_46 = arith.constant 0.000000e+00 : f32
      %72 = vector.broadcast %cst_46 : f32 to vector<8x3xf32>
      %73 = arith.subf %72, %71 : vector<8x3xf32>
      %c0_47 = arith.constant 0 : index
      %c0_48 = arith.constant 0 : index
      %74 = vector.load %arg9[%c0_47, %c0_48] : memref<8x1xf32, #tpu.memory_space<vmem>>, vector<8x1xf32>
      %c0_49 = arith.constant 0 : index
      %c0_50 = arith.constant 0 : index
      %75 = vector.load %arg7[%c0_49, %c0_50] : memref<8x3xf32, #tpu.memory_space<vmem>>, vector<8x3xf32>
      %76 = vector.broadcast %74 : vector<8x1xf32> to vector<8x3xf32>
      %77 = arith.subf %76, %75 : vector<8x3xf32>
      %cst_51 = arith.constant 6.250000e-02 : f32
      %78 = vector.broadcast %cst_51 : f32 to vector<8x3xf32>
      %79 = arith.mulf %77, %78 : vector<8x3xf32>
      %c0_52 = arith.constant 0 : index
      %c0_53 = arith.constant 0 : index
      %80 = vector.load %arg11[%c0_52, %c0_53] : memref<3x1xf32, #tpu.memory_space<vmem>>, vector<3x1xf32>
      %81 = tpu.transpose %80, [1, 0] : vector<3x1xf32> -> vector<1x3xf32>
      %c0_54 = arith.constant 0 : index
      %c0_55 = arith.constant 0 : index
      %82 = vector.load %arg8[%c0_54, %c0_55] : memref<8x3xf32, #tpu.memory_space<vmem>>, vector<8x3xf32>
      %cst_56 = arith.constant 2.000000e+00 : f32
      %83 = vector.broadcast %cst_56 : f32 to vector<8x3xf32>
      %84 = arith.mulf %83, %82 : vector<8x3xf32>
      %cst_57 = arith.constant 1.000000e+00 : f32
      %85 = vector.broadcast %cst_57 : f32 to vector<8x3xf32>
      %86 = arith.addf %84, %85 : vector<8x3xf32>
      %c0_58 = arith.constant 0 : index
      %c0_59 = arith.constant 0 : index
      %87 = vector.load %arg10[%c0_58, %c0_59] : memref<8x1xf32, #tpu.memory_space<vmem>>, vector<8x1xf32>
      %88 = vector.broadcast %87 : vector<8x1xf32> to vector<8x3xf32>
      %89 = vector.broadcast %81 : vector<1x3xf32> to vector<8x3xf32>
      %90 = arith.addf %88, %89 : vector<8x3xf32>
      %cst_60 = arith.constant 1.000000e+00 : f32
      %91 = vector.broadcast %cst_60 : f32 to vector<8x3xf32>
      %92 = arith.addf %90, %91 : vector<8x3xf32>
      %93 = arith.divf %86, %92 : vector<8x3xf32>
      %cst_61 = arith.constant 1.000000e+00 : f32
      %94 = vector.broadcast %cst_61 : f32 to vector<8x3xf32>
      %95 = arith.subf %94, %93 : vector<8x3xf32>
      %cst_62 = arith.constant 2.000000e+00 : f32
      %96 = vector.broadcast %cst_62 : f32 to vector<8x3xf32>
      %97 = arith.mulf %96, %73 : vector<8x3xf32>
      %cst_63 = arith.constant 5.000000e+00 : f32
      %98 = vector.broadcast %cst_63 : f32 to vector<8x3xf32>
      %99 = arith.mulf %98, %79 : vector<8x3xf32>
      %100 = arith.addf %97, %99 : vector<8x3xf32>
      %cst_64 = arith.constant 5.000000e+00 : f32
      %101 = vector.broadcast %cst_64 : f32 to vector<8x3xf32>
      %102 = arith.mulf %101, %95 : vector<8x3xf32>
      %103 = arith.addf %100, %102 : vector<8x3xf32>
      %c0_65 = arith.constant 0 : index
      %c0_66 = arith.constant 0 : index
      %c0_67 = arith.constant 0 : index
      %104 = vector.load %arg6[%c0_65, %c0_66, %c0_67] : memref<1x8x3xf32, #tpu.memory_space<vmem>>, vector<1x8x3xf32>
      %105 = vector.shape_cast %104 : vector<1x8x3xf32> to vector<8x3xf32>
      %106 = vector.shape_cast %103 : vector<8x3xf32> to vector<1x8x3xf32>
      tpu.vector_store %arg6[%c0_65, %c0_66, %c0_67], %106 {strides = array<i32>} : memref<1x8x3xf32, #tpu.memory_space<vmem>>, vector<1x8x3xf32>,
    } else {
    }
    return
  }
  func.func @transform_0(%arg0: i32, %arg1: i32) -> (i32, i32, i32) {
    %c0_i32 = arith.constant 0 : i32
    %c0_i32_0 = arith.constant 0 : i32
    %c0_i32_1 = arith.constant 0 : i32
    return %arg0, %c0_i32, %c0_i32_0 : i32, i32, i32
  }
  func.func @transform_1(%arg0: i32, %arg1: i32) -> (i32, i32, i32) {
    %c0_i32 = arith.constant 0 : i32
    %c0_i32_0 = arith.constant 0 : i32
    %c0_i32_1 = arith.constant 0 : i32
    return %arg0, %c0_i32, %c0_i32_0 : i32, i32, i32
  }
  func.func @transform_2(%arg0: i32, %arg1: i32) -> (i32, i32, i32) {
    %c0_i32 = arith.constant 0 : i32
    %c0_i32_0 = arith.constant 0 : i32
    return %arg0, %c0_i32, %arg1 : i32, i32, i32
  }
  func.func @transform_3(%arg0: i32, %arg1: i32) -> (i32, i32, i32) {
    %c0_i32 = arith.constant 0 : i32
    %c0_i32_0 = arith.constant 0 : i32
    return %arg0, %c0_i32, %arg1 : i32, i32, i32
  }
  func.func @transform_4(%arg0: i32, %arg1: i32) -> (i32, i32, i32) {
    %c0_i32 = arith.constant 0 : i32
    %c0_i32_0 = arith.constant 0 : i32
    %c0_i32_1 = arith.constant 0 : i32
    return %arg0, %c0_i32, %c0_i32_0 : i32, i32, i32
  }
}

</mosaic_0001>

<llo_original>
// kernel: tpu_custom_call.1
$region0: #{tpu_custom_call.1}
  #allocation0 [shape = 'u32[]', space=smem, size = 0x4, offset = 0x4, fixed_abs, tag = 'smem constant byte address 0x4 - core index']
  #allocation1 [shape = 'u32[144,128]{1,0:T(1,128)}', space=vmem, size = 0x12000, scoped, tag = 'internal scratch']
  #allocation2 [shape = 'f32[8,3]{1,0:T(8,128)}', space=vmem, size = 0x1000, scoped, tag = 'scratch operand']
  #allocation3 [shape = 'f32[8,3]{1,0:T(8,128)}', space=vmem, size = 0x1000, scoped, tag = 'scratch operand']
  #allocation4 [shape = 'f32[8,1]{1,0:T(8,128)}', space=vmem, size = 0x1000, scoped, tag = 'scratch operand']
  #allocation5 [shape = 'f32[8,1]{1,0:T(8,128)}', space=vmem, size = 0x1000, scoped, tag = 'scratch operand']
  #allocation6 [shape = 'f32[3,1]{1,0:T(4,128)}', space=vmem, size = 0x800, scoped, tag = 'scratch operand']
  %s0 = inlined_call_operand.vmem [shape: f32[2,8,6], index: 0, kind: input, shape index: {}]
  %s1 = inlined_call_operand.vmem [shape: s32[2,1,3], index: 1, kind: input, shape index: {}]
  %s2 = inlined_call_operand.vmem [shape: f32[2,8,16], index: 2, kind: input, shape index: {}]
  %s3 = inlined_call_operand.vmem [shape: f32[2,3,16], index: 3, kind: input, shape index: {}]
  %s4 = inlined_call_operand.vmem [shape: f32[2,8,3], index: 4, kind: output, shape index: {}]
  %s5 = sld [smem:[#allocation0]]
  $region57: #{tpu_custom_call.1} parent=0
    _
  %s7 = ssub.s32 1, %s5
  %s8 = scalar_select 0, %s7, %s5
  loop: start=0, step=1, limit=4
  $region2: #{tpu_custom_call.1} parent=0 // loop_pre_header
    _
  $region3: #{tpu_custom_call.1} parent=0 // loop_header
    %s10 = sphi 0, %s14
    %p11 = scmp.ge.s32.totalorder %s10, 4
    %s17 = sphi 0, %s29
    %s18 = sphi 0, %s25
    %s19 = sphi 0, %s17
    %s20 = sphi 0, %s18
    %s21 = sphi 0, %s19
    %s22 = sphi 0, %s20
    %s32 = sphi 0, %s34
    %s35 = sphi 0, %s32
    %s36 = sphi 0, %s35
    %s52 = sphi 0, %s36
    %s58 = sphi 0, %s60
    %s61 = sphi 0, %s58
    %s62 = sphi 0, %s61
    %s78 = sphi 0, %s62
    %s86 = sphi 0, %s88
    %s89 = sphi 0, %s86
    %s90 = sphi 0, %s89
    %s106 = sphi 0, %s90
    %s114 = sphi 0, %s116
    %s117 = sphi 0, %s114
    %s118 = sphi 0, %s117
    %s134 = sphi 0, %s118
    %s140 = sphi 0, %s142
    %s143 = sphi 0, %s140
    %s144 = sphi 0, %s143
    %s160 = sphi 0, %s144
  $region4: #{tpu_custom_call.1} parent=0 // loop_header_branch
    %13 = sbr.rel (%p11) target = $region8
  $region5: #{tpu_custom_call.1} parent=0 // loop_body
    %s15 = ssub.s32 %s10, 1
    %s16 = ssub.s32 %s10, 2
    %s23 = sadd.s32 1, %s18
    %p24 = scmp.ge.s32.totalorder %s23, 1
    %s25 = scalar_select %p24, 0, %s23
    %s26 = sadd.s32 1, %s17
    %s27 = scalar_select %p24, %s26, %s17
    %p28 = scmp.ge.s32.totalorder %s27, 2
    %s29 = scalar_select %p28, 0, %s27
    %s30 = ssub.s32 %s17, %s29
    %p31 = scmp.eq.s32.totalorder %s30, 0
    %s33 = sadd.s32 %s32, 1
    %s34 = scalar_select %p31, %s32, %s33
    %p37 = pneg %p31
    %p38 = scmp.eq.s32.totalorder %s10, 1
    %p39 = por %p37, %p38
    %p40 = scmp.ne.s32.totalorder %s32, %s35
    %p41 = scmp.eq.s32.totalorder %s10, 0
    %p42 = por %p40, %p41
    %p43 = scmp.ne.s32.totalorder %s32, %s35
    %p44 = scmp.eq.s32.totalorder %s15, 1
    %p45 = por %p43, %p44
    %p46 = scmp.ne.s32.totalorder %s35, %s36
    %p47 = scmp.eq.s32.totalorder %s15, 0
    %p48 = por %p46, %p47
    %p49 = scmp.ne.s32.totalorder %s35, %s36
    %p50 = scmp.eq.s32.totalorder %s16, 1
    %p51 = por %p49, %p50
    %p53 = scmp.ne.s32.totalorder %s36, %s52
    %p54 = scmp.eq.s32.totalorder %s16, 0
    %p55 = por %p53, %p54
    %s56 = ssub.s32 %s17, %s29
    %p57 = scmp.eq.s32.totalorder %s56, 0
    %s59 = sadd.s32 %s58, 1
    %s60 = scalar_select %p57, %s58, %s59
    %p63 = pneg %p57
    %p64 = scmp.eq.s32.totalorder %s10, 1
    %p65 = por %p63, %p64
    %p66 = scmp.ne.s32.totalorder %s58, %s61
    %p67 = scmp.eq.s32.totalorder %s10, 0
    %p68 = por %p66, %p67
    %p69 = scmp.ne.s32.totalorder %s58, %s61
    %p70 = scmp.eq.s32.totalorder %s15, 1
    %p71 = por %p69, %p70
    %p72 = scmp.ne.s32.totalorder %s61, %s62
    %p73 = scmp.eq.s32.totalorder %s15, 0
    %p74 = por %p72, %p73
    %p75 = scmp.ne.s32.totalorder %s61, %s62
    %p76 = scmp.eq.s32.totalorder %s16, 1
    %p77 = por %p75, %p76
    %p79 = scmp.ne.s32.totalorder %s62, %s78
    %p80 = scmp.eq.s32.totalorder %s16, 0
    %p81 = por %p79, %p80
    %s82 = ssub.s32 %s17, %s29
    %s83 = ssub.s32 %s18, %s25
    %s84 = sor.u32 %s82, %s83
    %p85 = scmp.eq.s32.totalorder %s84, 0
    %s87 = sadd.s32 %s86, 1
    %s88 = scalar_select %p85, %s86, %s87
    %p91 = pneg %p85
    %p92 = scmp.eq.s32.totalorder %s10, 1
    %p93 = por %p91, %p92
    %p94 = scmp.ne.s32.totalorder %s86, %s89
    %p95 = scmp.eq.s32.totalorder %s10, 0
    %p96 = por %p94, %p95
    %p97 = scmp.ne.s32.totalorder %s86, %s89
    %p98 = scmp.eq.s32.totalorder %s15, 1
    %p99 = por %p97, %p98
    %p100 = scmp.ne.s32.totalorder %s89, %s90
    %p101 = scmp.eq.s32.totalorder %s15, 0
    %p102 = por %p100, %p101
    %p103 = scmp.ne.s32.totalorder %s89, %s90
    %p104 = scmp.eq.s32.totalorder %s16, 1
    %p105 = por %p103, %p104
    %p107 = scmp.ne.s32.totalorder %s90, %s106
    %p108 = scmp.eq.s32.totalorder %s16, 0
    %p109 = por %p107, %p108
    %s110 = ssub.s32 %s17, %s29
    %s111 = ssub.s32 %s18, %s25
    %s112 = sor.u32 %s110, %s111
    %p113 = scmp.eq.s32.totalorder %s112, 0
    %s115 = sadd.s32 %s114, 1
    %s116 = scalar_select %p113, %s114, %s115
    %p119 = pneg %p113
    %p120 = scmp.eq.s32.totalorder %s10, 1
    %p121 = por %p119, %p120
    %p122 = scmp.ne.s32.totalorder %s114, %s117
    %p123 = scmp.eq.s32.totalorder %s10, 0
    %p124 = por %p122, %p123
    %p125 = scmp.ne.s32.totalorder %s114, %s117
    %p126 = scmp.eq.s32.totalorder %s15, 1
    %p127 = por %p125, %p126
    %p128 = scmp.ne.s32.totalorder %s117, %s118
    %p129 = scmp.eq.s32.totalorder %s15, 0
    %p130 = por %p128, %p129
    %p131 = scmp.ne.s32.totalorder %s117, %s118
    %p132 = scmp.eq.s32.totalorder %s16, 1
    %p133 = por %p131, %p132
    %p135 = scmp.ne.s32.totalorder %s118, %s134
    %p136 = scmp.eq.s32.totalorder %s16, 0
    %p137 = por %p135, %p136
    %s138 = ssub.s32 %s17, %s29
    %p139 = scmp.eq.s32.totalorder %s138, 0
    %s141 = sadd.s32 %s140, 1
    %s142 = scalar_select %p139, %s140, %s141
    %p145 = pneg %p139
    %p146 = scmp.eq.s32.totalorder %s10, 1
    %p147 = por %p145, %p146
    %p148 = scmp.ne.s32.totalorder %s140, %s143
    %p149 = scmp.eq.s32.totalorder %s10, 0
    %p150 = por %p148, %p149
    %p151 = scmp.ne.s32.totalorder %s140, %s143
    %p152 = scmp.eq.s32.totalorder %s15, 1
    %p153 = por %p151, %p152
    %p154 = scmp.ne.s32.totalorder %s143, %s144
    %p155 = scmp.eq.s32.totalorder %s15, 0
    %p156 = por %p154, %p155
    %p157 = scmp.ne.s32.totalorder %s143, %s144
    %p158 = scmp.eq.s32.totalorder %s16, 1
    %p159 = por %p157, %p158
    %p161 = scmp.ne.s32.totalorder %s144, %s160
    %p162 = scmp.eq.s32.totalorder %s16, 0
    %p163 = por %p161, %p162
    %p164 = scmp.le.s32.totalorder 1, %s10
    %p165 = scmp.lt.s32.totalorder %s10, 3
    %p166 = pnand %p164, %p165
    %p167 = pneg %p166
    // Predicated region
    $region9: #{tpu_custom_call.1} parent=5 // pred_check
      _
    $region10: #{tpu_custom_call.1} parent=5 // pred_check_branch
      %169 = sbr.rel (%p166) target = $region12
    $region11: #{tpu_custom_call.1} parent=5 // pred_region
      %s170 = ssub.s32 %s10, 1
    $region12: #{tpu_custom_call.1} parent=5 // pred_fallthru
      _
    %p171 = scmp.lt.s32.totalorder %s10, 2
    // Predicated region
    $region13: #{tpu_custom_call.1} parent=5 // pred_check
      %p172 = pneg %p171
    $region14: #{tpu_custom_call.1} parent=5 // pred_check_branch
      %174 = sbr.rel (%p172) target = $region16
    $region15: #{tpu_custom_call.1} parent=5 // pred_region
      // Predicated region
      $region17: #{tpu_custom_call.1} parent=15 // pred_check
        %p175 = pneg %p42
      $region18: #{tpu_custom_call.1} parent=15 // pred_check_branch
        %177 = sbr.rel (%p175) target = $region20
      $region19: #{tpu_custom_call.1} parent=15 // pred_region
        %p178 = scmp.lt.s32.totalorder %s17, 1
        %s179 = scalar_select %p178, %s17, 1
        %s180 = smul.addr %s179, 8
        %s181 = scalar_lea.vmem %s0, %s180
      $region20: #{tpu_custom_call.1} parent=15 // pred_fallthru
        _
      // Predicated region
      $region21: #{tpu_custom_call.1} parent=15 // pred_check
        %p182 = pneg %p68
      $region22: #{tpu_custom_call.1} parent=15 // pred_check_branch
        %184 = sbr.rel (%p182) target = $region24
      $region23: #{tpu_custom_call.1} parent=15 // pred_region
        %p185 = scmp.lt.s32.totalorder %s17, 1
        %s186 = scalar_select %p185, %s17, 1
        %s187 = scalar_lea.vmem %s1, %s186
      $region24: #{tpu_custom_call.1} parent=15 // pred_fallthru
        _
      // Predicated region
      $region25: #{tpu_custom_call.1} parent=15 // pred_check
        %p188 = pneg %p96
      $region26: #{tpu_custom_call.1} parent=15 // pred_check_branch
        %190 = sbr.rel (%p188) target = $region28
      $region27: #{tpu_custom_call.1} parent=15 // pred_region
        %p191 = scmp.lt.s32.totalorder %s17, 1
        %s192 = scalar_select %p191, %s17, 1
        %p193 = scmp.lt.s32.totalorder %s18, 0
        %s194 = scalar_select %p193, %s18, 0
        %s195 = sadd.s32 %s194, %s192
        %s196 = smul.addr %s195, 8
        %s197 = scalar_lea.vmem %s2, %s196
      $region28: #{tpu_custom_call.1} parent=15 // pred_fallthru
        _
      // Predicated region
      $region29: #{tpu_custom_call.1} parent=15 // pred_check
        %p198 = pneg %p124
      $region30: #{tpu_custom_call.1} parent=15 // pred_check_branch
        %200 = sbr.rel (%p198) target = $region32
      $region31: #{tpu_custom_call.1} parent=15 // pred_region
        %p201 = scmp.lt.s32.totalorder %s17, 1
        %s202 = scalar_select %p201, %s17, 1
        %p203 = scmp.lt.s32.totalorder %s18, 0
        %s204 = scalar_select %p203, %s18, 0
        %s205 = sadd.s32 %s204, %s202
        %s206 = smul.addr %s205, 4
        %s207 = scalar_lea.vmem %s3, %s206
      $region32: #{tpu_custom_call.1} parent=15 // pred_fallthru
        _
    $region16: #{tpu_custom_call.1} parent=5 // pred_fallthru
      _
    %p208 = scmp.le.s32.totalorder 1, %s10
    %p209 = scmp.lt.s32.totalorder %s10, 3
    %p210 = pnand %p208, %p209
    %p211 = pneg %p210
    // Predicated region
    $region33: #{tpu_custom_call.1} parent=5 // pred_check
      _
    $region34: #{tpu_custom_call.1} parent=5 // pred_check_branch
      %213 = sbr.rel (%p210) target = $region36
    $region35: #{tpu_custom_call.1} parent=5 // pred_region
      %s214 = ssub.s32 %s10, 1
      %p215 = scmp.lt.s32.totalorder %s19, 1
      %s216 = scalar_select %p215, %s19, 1
      %s217 = smul.addr %s216, 8
      %s218 = scalar_lea.vmem %s0, %s217
      %p219 = pneg %p48
      %p220 = pneg %p45
      %p221 = scmp.lt.s32.totalorder %s19, 1
      %s222 = scalar_select %p221, %s19, 1
      %s223 = scalar_lea.vmem %s1, %s222
      %p224 = pneg %p74
      %p225 = pneg %p71
      %p226 = scmp.lt.s32.totalorder %s19, 1
      %s227 = scalar_select %p226, %s19, 1
      %p228 = scmp.lt.s32.totalorder %s20, 0
      %s229 = scalar_select %p228, %s20, 0
      %s230 = sadd.s32 %s229, %s227
      %s231 = smul.addr %s230, 8
      %s232 = scalar_lea.vmem %s2, %s231
      %p233 = pneg %p102
      %p234 = pneg %p99
      %p235 = scmp.lt.s32.totalorder %s19, 1
      %s236 = scalar_select %p235, %s19, 1
      %p237 = scmp.lt.s32.totalorder %s20, 0
      %s238 = scalar_select %p237, %s20, 0
      %s239 = sadd.s32 %s238, %s236
      %s240 = smul.addr %s239, 4
      %s241 = scalar_lea.vmem %s3, %s240
      %p242 = pneg %p130
      %p243 = pneg %p127
      %p244 = pneg %p156
      %p245 = pneg %p153
      %p246 = scmp.lt.s32.totalorder %s19, 1
      %s247 = scalar_select %p246, %s19, 1
      %s248 = smul.addr %s247, 8
      %s249 = scalar_lea.vmem %s4, %s248
      %p250 = scmp.lt.s32.totalorder %s19, 1
      %s251 = scalar_select %p250, %s19, 1
      %s252 = smul.addr %s251, 8
      %s253 = scalar_lea.vmem %s0, %s252
      %p254 = scmp.lt.s32.totalorder %s19, 1
      %s255 = scalar_select %p254, %s19, 1
      %s256 = scalar_lea.vmem %s1, %s255
      %p257 = scmp.lt.s32.totalorder %s19, 1
      %s258 = scalar_select %p257, %s19, 1
      %p259 = scmp.lt.s32.totalorder %s20, 0
      %s260 = scalar_select %p259, %s20, 0
      %s261 = sadd.s32 %s260, %s258
      %s262 = smul.addr %s261, 8
      %s263 = scalar_lea.vmem %s2, %s262
      %p264 = scmp.lt.s32.totalorder %s19, 1
      %s265 = scalar_select %p264, %s19, 1
      %p266 = scmp.lt.s32.totalorder %s20, 0
      %s267 = scalar_select %p266, %s20, 0
      %s268 = sadd.s32 %s267, %s265
      %s269 = smul.addr %s268, 4
      %s270 = scalar_lea.vmem %s3, %s269
      %p271 = scmp.lt.s32.totalorder %s19, 1
      %s272 = scalar_select %p271, %s19, 1
      %s273 = smul.addr %s272, 8
      %s274 = scalar_lea.vmem %s4, %s273
      %p276 = scmp.eq.s32.totalorder %s20, 0
      // Predicated region
      $region37: #{tpu_custom_call.1} parent=35 // pred_check
        %p277 = pneg %p276
      $region38: #{tpu_custom_call.1} parent=35 // pred_check_branch
        %279 = sbr.rel (%p277) target = $region40
      $region39: #{tpu_custom_call.1} parent=35 // pred_region
        %vm280 = vcmask 23552
        %281 = vst.msk [vmem:[#allocation2] sm:$0xff] %vm280, 0.0
        %282 = vst.msk [vmem:[#allocation3] sm:$0xff] %vm280, 0.0
        %vm283 = vcmask 7168
        %284 = vst.msk [vmem:[#allocation4] sm:$0xff] %vm283, 0.0
        %285 = vst.msk [vmem:[#allocation5] sm:$0xff] %vm283, 0.0
        %vm286 = vcmask 2048
        %287 = vst.msk [vmem:[#allocation6] sm:$0x7] %vm286, 0.0
      $region40: #{tpu_custom_call.1} parent=35 // pred_fallthru
        _
      %v288 = vld [vmem:[%s263] sm:$0xff]
      %v289 = vld [vmem:[%s270] sm:$0x7]
      %v290 = vand.u32 2147483647, %v288
      %v291 = vsub.f32 0.0, %v290
      %v292 = vmul.f32 %v291, 1.442695
      %v293 = vpow.pop %v292
      %v294 = vadd.f32 %v293, 1.0
      %v295 = vlog2.pop %v294
      %v296 = vmul.f32 %v295, 0.6931472
      %v297 = vmax.f32 %v288, 0.0
      %v298 = vadd.f32 %v297, %v296
      %v299 = vrcp.pop %v294
      %vm300 = vcmp.ge.f32.partialorder %v288, 0.0
      %v301 = vmul.f32 %v293, %v299
      %v302 = vsel %vm300, %v299, %v301
      %v303 = vld [vmem:[#allocation4] sm:$0xff]
      %vm304 = vcmask 130048
      %v305 = vsel %vm304, %v298, 0.0
      %306 = vadd.xlane.f32.xlu0 %v305
      %v307 = vpop.xlane.xlu0 %306
      %v308 = vadd.f32 %v303, %v307
      %vm309 = vcmask 7168
      %310 = vst.msk [vmem:[#allocation4] sm:$0xff] %vm309, %v308
      %v311 = vld [vmem:[#allocation5] sm:$0xff]
      %v312 = vsel %vm304, %v302, 0.0
      %313 = vadd.xlane.f32.xlu0 %v312
      %v314 = vpop.xlane.xlu0 %313
      %v315 = vadd.f32 %v311, %v314
      %316 = vst.msk [vmem:[#allocation5] sm:$0xff] %vm309, %v315
      %v317 = vld [vmem:[#allocation6] sm:$0x7]
      %vm318 = vcmask 124928
      %v319 = vsel %vm318, %v289, 0.0
      %320 = vadd.xlane.f32.xlu0 %v319
      %v321 = vpop.xlane.xlu0 %320
      %v322 = vadd.f32 %v317, %v321
      %vm323 = vcmask 2048
      %324 = vst.msk [vmem:[#allocation6] sm:$0x7] %vm323, %v322
      %v325 = vpack.c.bf16 %v289, %v289
      %v326 = vld [vmem:[#allocation2] sm:$0xff]
      %v327 = vpack.c.bf16 %v288, %v288
      %v329 = vsel %vm304, %v327, 0
      %v332 = vsel %vm304, %v325, 0
      %334 = vmatprep.subr.bf16.mxu0 0
      %335 = vmatpush1.bf16.xpose.msra.mxu0 %v332
      %336 = vmatprep.subr.bf16.mxu0 0
      %337 = vmatpush1.bf16.xpose.msra.mxu0 0
      %338 = vmatprep.subr.bf16.mxu0 0
      %339 = vmatpush1.bf16.xpose.msra.mxu0 0
      %340 = vmatprep.subr.bf16.mxu0 0
      %341 = vmatpush1.bf16.xpose.msra.mxu0 0
      %342 = vmatprep.subr.bf16.mxu0 0
      %343 = vmatpush1.bf16.xpose.msra.mxu0 0
      %344 = vmatprep.subr.bf16.mxu0 0
      %345 = vmatpush1.bf16.xpose.msra.mxu0 0
      %346 = vmatprep.subr.bf16.mxu0 0
      %347 = vmatpush1.bf16.xpose.msra.mxu0 0
      %348 = vmatprep.subr.bf16.mxu0 0
      %349 = vmatpush1.bf16.xpose.msra.mxu0 0
      %350 = vmatprep.subr.bf16.mxu0 0
      %351 = vmatpush1.bf16.xpose.msra.mxu0 0
      %352 = vmatprep.subr.bf16.mxu0 0
      %353 = vmatpush1.bf16.xpose.msra.mxu0 0
      %354 = vmatprep.subr.bf16.mxu0 0
      %355 = vmatpush1.bf16.xpose.msra.mxu0 0
      %356 = vmatprep.subr.bf16.mxu0 0
      %357 = vmatpush1.bf16.xpose.msra.mxu0 0
      %358 = vmatprep.subr.bf16.mxu0 0
      %359 = vmatpush1.bf16.xpose.msra.mxu0 0
      %360 = vmatprep.subr.bf16.mxu0 0
      %361 = vmatpush1.bf16.xpose.msra.mxu0 0
      %362 = vmatprep.subr.bf16.mxu0 0
      %363 = vmatpush1.bf16.xpose.msra.mxu0 0
      %364 = vmatprep.subr.bf16.mxu0 0
      %365 = vmatpush1.bf16.xpose.msra.mxu0 0
      %366 = vmatprep.mubr.bf16.mxu0 0
      %367 = vmatmul.mubr.bf16.gmra.mrb[0].mxu0 %v329
      %v368 = vpop.f32.mrb[0].mxu0
      %v369 = vadd.f32 0.0, %v368
      %v370 = vpop.f32.mrb[0].mxu0
      %v371 = vpop.f32.mrb[0].mxu0
      %v372 = vpop.f32.mrb[0].mxu0
      %373 = vdwg.mxu0
      %v374 = vadd.f32 %v326, %v369
      %vm375 = vcmask 23552
      %376 = vst.msk [vmem:[#allocation2] sm:$0xff] %vm375, %v374
      %v377 = vld [vmem:[#allocation3] sm:$0xff]
      %v378 = vpack.c.bf16 %v302, %v302
      %v380 = vsel %vm304, %v378, 0
      %382 = vmatprep.subr.bf16.mxu0 0
      %383 = vmatpush1.bf16.xpose.msra.mxu0 %v332
      %384 = vmatprep.subr.bf16.mxu0 0
      %385 = vmatpush1.bf16.xpose.msra.mxu0 0
      %386 = vmatprep.subr.bf16.mxu0 0
      %387 = vmatpush1.bf16.xpose.msra.mxu0 0
      %388 = vmatprep.subr.bf16.mxu0 0
      %389 = vmatpush1.bf16.xpose.msra.mxu0 0
      %390 = vmatprep.subr.bf16.mxu0 0
      %391 = vmatpush1.bf16.xpose.msra.mxu0 0
      %392 = vmatprep.subr.bf16.mxu0 0
      %393 = vmatpush1.bf16.xpose.msra.mxu0 0
      %394 = vmatprep.subr.bf16.mxu0 0
      %395 = vmatpush1.bf16.xpose.msra.mxu0 0
      %396 = vmatprep.subr.bf16.mxu0 0
      %397 = vmatpush1.bf16.xpose.msra.mxu0 0
      %398 = vmatprep.subr.bf16.mxu0 0
      %399 = vmatpush1.bf16.xpose.msra.mxu0 0
      %400 = vmatprep.subr.bf16.mxu0 0
      %401 = vmatpush1.bf16.xpose.msra.mxu0 0
      %402 = vmatprep.subr.bf16.mxu0 0
      %403 = vmatpush1.bf16.xpose.msra.mxu0 0
      %404 = vmatprep.subr.bf16.mxu0 0
      %405 = vmatpush1.bf16.xpose.msra.mxu0 0
      %406 = vmatprep.subr.bf16.mxu0 0
      %407 = vmatpush1.bf16.xpose.msra.mxu0 0
      %408 = vmatprep.subr.bf16.mxu0 0
      %409 = vmatpush1.bf16.xpose.msra.mxu0 0
      %410 = vmatprep.subr.bf16.mxu0 0
      %411 = vmatpush1.bf16.xpose.msra.mxu0 0
      %412 = vmatprep.subr.bf16.mxu0 0
      %413 = vmatpush1.bf16.xpose.msra.mxu0 0
      %414 = vmatprep.mubr.bf16.mxu0 0
      %415 = vmatmul.mubr.bf16.gmra.mrb[0].mxu0 %v380
      %v416 = vpop.f32.mrb[0].mxu0
      %v417 = vadd.f32 0.0, %v416
      %v418 = vpop.f32.mrb[0].mxu0
      %v419 = vpop.f32.mrb[0].mxu0
      %v420 = vpop.f32.mrb[0].mxu0
      %421 = vdwg.mxu0
      %v422 = vadd.f32 %v377, %v417
      %423 = vst.msk [vmem:[#allocation3] sm:$0xff] %vm375, %v422
      // Predicated region
      $region41: #{tpu_custom_call.1} parent=35 // pred_check
        %p424 = pneg %p276
      $region42: #{tpu_custom_call.1} parent=35 // pred_check_branch
        %426 = sbr.rel (%p424) target = $region44
      $region43: #{tpu_custom_call.1} parent=35 // pred_region
        %v427 = vld [vmem:[%s253] sm:$0xff]
        %v428 = vld [vmem:[%s256] sm:$0x1]
        %vm429 = vcmask 48128
        %v430 = vsel %vm429, %v427, -inf
        %431 = vmax.xlane.f32.xlu0 %v430
        %v432 = vpop.xlane.xlu0 %431
        %v433 = vsub.f32 %v427, %v432
        %v434 = vmul.f32 %v433, 1.442695
        %v435 = vpow.pop %v434
        %v436 = vsel %vm429, %v435, 0.0
        %437 = vadd.xlane.f32.xlu0 %v436
        %v438 = vpop.xlane.xlu0 %437
        %v439 = vrcp.pop %v438
        %v440 = vmul.f32 %v435, %v439
        %v441 = vlaneseq
        %v442 = vshrl.u32 %v441, 7
        %v443 = vlaneseq
        %v444 = vshrl.u32 %v443, 7
        %v445 = vsub.s32 0, %v444
        %v446 = vrot.slane %v428, %v445
        %vm447 = vcmp.eq.s32.totalorder %v442, %v446
        %v448 = vsel %vm447, 1, 0
        %v449 = vcvt.s32.f32 %v448
        %v451 = vsel %vm429, %v440, 0
        %vm453 = vcmask 1045504
        %v455 = vsel %vm453, %v449, 0
        %457 = vmatprep.subr.mxu0 0.0
        %458 = vmatpush1.msra.mxu0 %v455
        %459 = vmatprep.subr.mxu0 0.0
        %460 = vmatpush1.msra.mxu0 0.0
        %461 = vmatprep.subr.mxu0 0.0
        %462 = vmatpush1.msra.mxu0 0.0
        %463 = vmatprep.subr.mxu0 0.0
        %464 = vmatpush1.msra.mxu0 0.0
        %465 = vmatprep.subr.mxu0 0.0
        %466 = vmatpush1.msra.mxu0 0.0
        %467 = vmatprep.subr.mxu0 0.0
        %468 = vmatpush1.msra.mxu0 0.0
        %469 = vmatprep.subr.mxu0 0.0
        %470 = vmatpush1.msra.mxu0 0.0
        %471 = vmatprep.subr.mxu0 0.0
        %472 = vmatpush1.msra.mxu0 0.0
        %473 = vmatprep.subr.mxu0 0.0
        %474 = vmatpush1.msra.mxu0 0.0
        %475 = vmatprep.subr.mxu0 0.0
        %476 = vmatpush1.msra.mxu0 0.0
        %477 = vmatprep.subr.mxu0 0.0
        %478 = vmatpush1.msra.mxu0 0.0
        %479 = vmatprep.subr.mxu0 0.0
        %480 = vmatpush1.msra.mxu0 0.0
        %481 = vmatprep.subr.mxu0 0.0
        %482 = vmatpush1.msra.mxu0 0.0
        %483 = vmatprep.subr.mxu0 0.0
        %484 = vmatpush1.msra.mxu0 0.0
        %485 = vmatprep.subr.mxu0 0.0
        %486 = vmatpush1.msra.mxu0 0.0
        %487 = vmatprep.subr.mxu0 0.0
        %488 = vmatpush1.msra.mxu0 0.0
        %489 = vmatprep.subr.mxu0 0.0
        %490 = vmatpush1.msra.mxu0 0.0
        %491 = vmatprep.subr.mxu0 0.0
        %492 = vmatpush1.msra.mxu0 0.0
        %493 = vmatprep.subr.mxu0 0.0
        %494 = vmatpush1.msra.mxu0 0.0
        %495 = vmatprep.subr.mxu0 0.0
        %496 = vmatpush1.msra.mxu0 0.0
        %497 = vmatprep.subr.mxu0 0.0
        %498 = vmatpush1.msra.mxu0 0.0
        %499 = vmatprep.subr.mxu0 0.0
        %500 = vmatpush1.msra.mxu0 0.0
        %501 = vmatprep.subr.mxu0 0.0
        %502 = vmatpush1.msra.mxu0 0.0
        %503 = vmatprep.subr.mxu0 0.0
        %504 = vmatpush1.msra.mxu0 0.0
        %505 = vmatprep.subr.mxu0 0.0
        %506 = vmatpush1.msra.mxu0 0.0
        %507 = vmatprep.subr.mxu0 0.0
        %508 = vmatpush1.msra.mxu0 0.0
        %509 = vmatprep.subr.mxu0 0.0
        %510 = vmatpush1.msra.mxu0 0.0
        %511 = vmatprep.subr.mxu0 0.0
        %512 = vmatpush1.msra.mxu0 0.0
        %513 = vmatprep.subr.mxu0 0.0
        %514 = vmatpush1.msra.mxu0 0.0
        %515 = vmatprep.subr.mxu0 0.0
        %516 = vmatpush1.msra.mxu0 0.0
        %517 = vmatprep.subr.mxu0 0.0
        %518 = vmatpush1.msra.mxu0 0.0
        %519 = vmatprep.subr.mxu0 0.0
        %520 = vmatpush1.msra.mxu0 0.0
        %521 = vmatprep.mubr.f32.mxu0 0.0
        %522 = vmatmul.mubr.f32.gmra.mrb[0].mxu0 %v451
        %v523 = vpop.f32.mrb[0].mxu0
        %v524 = vadd.f32 0.0, %v523
        %v525 = vpop.f32.mrb[0].mxu0
        %526 = vdwg.mxu0
        %v527 = vsub.f32 0.0, %v524
        %v528 = vld [vmem:[#allocation4] sm:$0xff]
        %v529 = vld [vmem:[#allocation2] sm:$0xff]
        %531 = vset.pattern.permute.xlu0 0
        %532 = vperm.xlu0 %531, %v528
        %v533 = vpop.permute.xlu0 %532
        %v535 = vsub.f32 %v533, %v529
        %v536 = vmul.f32 %v535, 0.0625
        %v537 = vld [vmem:[#allocation6] sm:$0x7]
        %538 = vxpose.xlu0.b32.start [1/16] %v537, 128
        %539 = vxpose.xlu0.b32.cont [2/16] 0.0, 128
        %540 = vxpose.xlu0.b32.cont [3/16] 0.0, 128
        %541 = vxpose.xlu0.b32.cont [4/16] 0.0, 128
        %542 = vxpose.xlu0.b32.cont [5/16] 0.0, 128
        %543 = vxpose.xlu0.b32.cont [6/16] 0.0, 128
        %544 = vxpose.xlu0.b32.cont [7/16] 0.0, 128
        %545 = vxpose.xlu0.b32.cont [8/16] 0.0, 128
        %546 = vxpose.xlu0.b32.cont [9/16] 0.0, 128
        %547 = vxpose.xlu0.b32.cont [10/16] 0.0, 128
        %548 = vxpose.xlu0.b32.cont [11/16] 0.0, 128
        %549 = vxpose.xlu0.b32.cont [12/16] 0.0, 128
        %550 = vxpose.xlu0.b32.cont [13/16] 0.0, 128
        %551 = vxpose.xlu0.b32.cont [14/16] 0.0, 128
        %552 = vxpose.xlu0.b32.cont [15/16] 0.0, 128
        %553 = vxpose.xlu0.b32.end [16/16] 0.0, 128
        %v554 = vpop.trf.xlu0
        %v555 = vpop.trf.xlu0
        %v556 = vpop.trf.xlu0
        %v557 = vpop.trf.xlu0
        %v558 = vpop.trf.xlu0
        %v559 = vpop.trf.xlu0
        %v560 = vpop.trf.xlu0
        %v561 = vpop.trf.xlu0
        %v562 = vpop.trf.xlu0
        %v563 = vpop.trf.xlu0
        %v564 = vpop.trf.xlu0
        %v565 = vpop.trf.xlu0
        %v566 = vpop.trf.xlu0
        %v567 = vpop.trf.xlu0
        %v568 = vpop.trf.xlu0
        %v569 = vpop.trf.xlu0
        %v570 = vld [vmem:[#allocation3] sm:$0xff]
        %v571 = vmul.f32 %v570, 2.0
        %v572 = vadd.f32 %v571, 1.0
        %v573 = vld [vmem:[#allocation5] sm:$0xff]
        %575 = vset.pattern.permute.xlu0 0
        %576 = vperm.xlu0 %575, %v573
        %v577 = vpop.permute.xlu0 %576
        %v579 = vlaneseq
        %v580 = vshrl.u32 %v579, 7
        %v581 = vsub.s32 0, %v580
        %v582 = vrot.slane %v554, %v581
        %v583 = vadd.f32 %v577, %v582
        %v584 = vadd.f32 %v583, 1.0
        %v585 = vrcp.pop %v584
        %v586 = vmul.f32 %v572, %v585
        %v587 = vsub.f32 1.0, %v586
        %v588 = vmul.f32 %v527, 2.0
        %v589 = vmul.f32 %v536, 5.0
        %v590 = vadd.f32 %v588, %v589
        %v591 = vmul.f32 %v587, 5.0
        %v592 = vadd.f32 %v590, %v591
        %593 = vst.msk [vmem:[%s274] sm:$0xff] %vm375, %v592
      $region44: #{tpu_custom_call.1} parent=35 // pred_fallthru
        _
      %p594 = scmp.lt.s32.totalorder %s19, 1
      %s595 = scalar_select %p594, %s19, 1
      %s596 = smul.addr %s595, 8
      %s597 = scalar_lea.vmem %s4, %s596
      // Predicated region
      $region45: #{tpu_custom_call.1} parent=35 // pred_check
        %p598 = pneg %p153
      $region46: #{tpu_custom_call.1} parent=35 // pred_check_branch
        %600 = sbr.rel (%p598) target = $region48
      $region47: #{tpu_custom_call.1} parent=35 // pred_region
        _
      $region48: #{tpu_custom_call.1} parent=35 // pred_fallthru
        _
    $region36: #{tpu_custom_call.1} parent=5 // pred_fallthru
      _
    %p601 = scmp.le.s32.totalorder 2, %s10
    // Predicated region
    $region49: #{tpu_custom_call.1} parent=5 // pred_check
      %p602 = pneg %p601
    $region50: #{tpu_custom_call.1} parent=5 // pred_check_branch
      %604 = sbr.rel (%p602) target = $region52
    $region51: #{tpu_custom_call.1} parent=5 // pred_region
      %s605 = ssub.s32 %s10, 2
      // Predicated region
      $region53: #{tpu_custom_call.1} parent=51 // pred_check
        %p606 = pneg %p159
      $region54: #{tpu_custom_call.1} parent=51 // pred_check_branch
        %608 = sbr.rel (%p606) target = $region56
      $region55: #{tpu_custom_call.1} parent=51 // pred_region
        %p609 = scmp.lt.s32.totalorder %s21, 1
        %s610 = scalar_select %p609, %s21, 1
        %s611 = smul.addr %s610, 8
        %s612 = scalar_lea.vmem %s4, %s611
      $region56: #{tpu_custom_call.1} parent=51 // pred_fallthru
        _
    $region52: #{tpu_custom_call.1} parent=5 // pred_fallthru
      _
  $region6: #{tpu_custom_call.1} parent=0 // loop_footer
    %s14 = sadd.s32 1, %s10
  $region7: #{tpu_custom_call.1} parent=0 // loop_footer_branch
    %9 = sbr.rel target = $region3
  $region8: #{tpu_custom_call.1} parent=0 // loop_exit
    _

</llo_original>
